<compile_context>
chip_gen: v5e
topology: v5e:2x2
jax: 0.10.0
libtpu: 0.0.40
codegen_flags: <defaults>
</compile_context>

<pallas_src>
import jax
import jax.numpy as jnp
from jax.experimental import pallas as pl
from jax.experimental.pallas import tpu as pltpu


# ----------------------------------------------------------------------------
# Kernel: relu(x @ W_fused + b_fused) then final_dense via VPU reduce.
# ----------------------------------------------------------------------------
def fused_forward_kernel(x_ref, w_ref, b_ref, fw_ref, fb_ref, out_ref):
    # x_ref : (TB, Kp)  = [pool(title[:-1]) | pool(title[1:]) | pool(full[:-1])
    #                      | pool(full[1:]) | category | zero-pad]   (bf16/f32)
    # w_ref : (Kp, Hi)  fused (conv|category_out) @ inter_dense weight (padded)
    # b_ref : (1, Hi)   fused bias (f32)
    # fw_ref: (1, Hi)   final_dense weight row (f32, zero-padded)
    # fb_ref: (1, 1)    final_dense bias (f32)
    inter = jnp.dot(x_ref[...], w_ref[...], preferred_element_type=jnp.float32)
    inter = jnp.maximum(inter + b_ref[...], 0.0)                 # bias + ReLU (VPU, f32)
    # final_dense (2H -> 1): broadcast-multiply + lane reduce (XLU), not an MXU pass
    out_ref[...] = jnp.sum(inter * fw_ref[...], axis=-1, keepdims=True) + fb_ref[...]


# ----------------------------------------------------------------------------
# One-time parameter preparation (hoisted out of the forward path).
# ----------------------------------------------------------------------------
def prepare_params(params, *, use_bf16=True):
    """Fold conv1/conv2/category_out into inter_dense and pad to lane alignment.

    pool(conv(emb)) == W0 @ mean(emb[:-1]) + W1 @ mean(emb[1:]) + b, and there
    is no nonlinearity before inter_dense, so everything up to the ReLU folds
    into a single (4H + Ncat, 2H) matrix.
    """
    H = params["c1b"].shape[1]
    n_cat = params["catw"].shape[0]
    iw_t = params["iw"][0:H, :]
    iw_f = params["iw"][H:2 * H, :]
    iw_c = params["iw"][2 * H:3 * H, :]

    w_fused = jnp.concatenate([
        params["c1w"][0] @ iw_t, params["c1w"][1] @ iw_t,
        params["c2w"][0] @ iw_f, params["c2w"][1] @ iw_f,
        params["catw"] @ iw_c,
    ], axis=0)                                                   # (4H + Ncat, 2H)
    b_fused = (params["c1b"] @ iw_t + params["c2b"] @ iw_f
               + params["catb"] @ iw_c + params["ib"])           # (1, 2H)

    K = 4 * H + n_cat
    Kp = 128 * pl.cdiv(K, 128)                                   # MXU/lane-aligned contraction
    H2 = 2 * H
    Hi = 128 * pl.cdiv(H2, 128)                                  # lane-dense matmul output

    w_fused = jnp.pad(w_fused, ((0, Kp - K), (0, Hi - H2)))
    b_fused = jnp.pad(b_fused, ((0, 0), (0, Hi - H2)))
    fw_row = jnp.pad(params["fw"], ((0, Hi - H2), (0, 0))).T     # (1, Hi)
    fb = params["fb"].reshape(1, 1)

    compute_dtype = jnp.bfloat16 if use_bf16 else jnp.float32
    return {
        "title_emb": params["title_emb"],
        "full_emb": params["full_emb"],
        "w_fused": w_fused.astype(compute_dtype),
        "b_fused": b_fused.astype(jnp.float32),
        "fw_row": fw_row.astype(jnp.float32),
        "fb": fb.astype(jnp.float32),
        "H": H, "n_cat": n_cat, "K": K, "Kp": Kp, "Hi": Hi,
        "dtype": compute_dtype,
    }


# ----------------------------------------------------------------------------
# Forward pass (eval mode).
# ----------------------------------------------------------------------------
def three_inputs_net(title_ids, full_ids, cat_feats, fused, *, batch_tile=1024):
    dtype = fused["dtype"]
    K, Kp, Hi = fused["K"], fused["Kp"], fused["Hi"]
    B = title_ids.shape[0]

    # ------- JAX glue: embedding gather + window pooling (one sum per branch) -------
    def pooled_windows(emb):
        # mean(emb[:-1]) and mean(emb[1:]) derived from a single sum reduction.
        L = emb.shape[1]
        s = emb.sum(axis=1)
        inv = 1.0 / (L - 1)                 # L >= 2 required (Conv1d kernel_size=2)
        return (s - emb[:, -1, :]) * inv, (s - emb[:, 0, :]) * inv

    t_l, t_r = pooled_windows(fused["title_emb"][title_ids])    # (B, H) each
    f_l, f_r = pooled_windows(fused["full_emb"][full_ids])
    x = jnp.concatenate([t_l, t_r, f_l, f_r,
                         cat_feats.astype(jnp.float32)], axis=1)  # (B, K)
    x = jnp.pad(x, ((0, 0), (0, Kp - K))).astype(dtype)           # lane-pad, cast to bf16/f32

    # ------- batch tiling -------
    sub = 16 if dtype == jnp.bfloat16 else 8                      # sublane packing multiple
    tile = max(sub, (batch_tile // sub) * sub)                    # defensive rounding
    B_round = sub * pl.cdiv(B, sub)
    if B_round > tile:
        TB = tile                                                 # many grid steps already
    elif B_round >= 2 * sub:
        # Split into >=2 tiles so v7x megacore can shard the "parallel" batch axis
        # across both TensorCores; cost on 1-TC v5e/v6e is one ~0.35us grid step.
        TB = sub * pl.cdiv(B_round // 2, sub)
    else:
        TB = B_round
    B_pad = TB * pl.cdiv(B, TB)
    if B_pad != B:
        x = jnp.pad(x, ((0, B_pad - B), (0, 0)))

    itemsize = jnp.dtype(dtype).itemsize
    cost = pl.CostEstimate(
        flops=2 * B_pad * Kp * Hi + 3 * B_pad * Hi,
        transcendentals=0,
        bytes_accessed=(B_pad * Kp * itemsize          # streamed activations (binding)
                        + Kp * Hi * itemsize           # resident fused weight
                        + 2 * Hi * 4 + 4               # biases + final weight
                        + B_pad * 4),                  # output
    )

    # TODO(synk): at large H (hid>=512) add pipeline_mode=pl.Buffered(1) on the
    # resident-weight spec and set vmem_limit_bytes explicitly for v7x's 32 MiB
    # scoped VMEM; unnecessary at these sizes.
    out = pl.pallas_call(
        fused_forward_kernel,
        out_shape=jax.ShapeDtypeStruct((B_pad, 1), jnp.float32),
        grid=(B_pad // TB,),
        in_specs=[
            pl.BlockSpec((TB, Kp), lambda i: (i, 0)),             # per-tile activations
            pl.BlockSpec((Kp, Hi), lambda i: (0, 0)),             # resident fused weight
            pl.BlockSpec((1, Hi), lambda i: (0, 0)),              # resident fused bias
            pl.BlockSpec((1, Hi), lambda i: (0, 0)),              # resident final weight
            pl.BlockSpec((1, 1), lambda i: (0, 0)),               # resident final bias
        ],
        out_specs=pl.BlockSpec((TB, 1), lambda i: (i, 0)),
        compiler_params=pltpu.CompilerParams(
            dimension_semantics=("parallel",)),                   # independent batch tiles
        cost_estimate=cost,
    )(x, fused["w_fused"], fused["b_fused"], fused["fw_row"], fused["fb"])
    return out[:B]


# ----------------------------------------------------------------------------
# Pure-JAX reference of the PyTorch forward (eval mode).
# ----------------------------------------------------------------------------
def reference_net(title_ids, full_ids, cat_feats, params):
    emb_t = params["title_emb"][title_ids]
    emb_f = params["full_emb"][full_ids]
    conv_t = (jnp.einsum("blh,ho->blo", emb_t[:, :-1, :], params["c1w"][0])
              + jnp.einsum("blh,ho->blo", emb_t[:, 1:, :], params["c1w"][1])
              + params["c1b"])
    title = conv_t.mean(axis=1)                                   # pool1 -> (B, H)
    conv_f = (jnp.einsum("blh,ho->blo", emb_f[:, :-1, :], params["c2w"][0])
              + jnp.einsum("blh,ho->blo", emb_f[:, 1:, :], params["c2w"][1])
              + params["c2b"])
    full = conv_f.mean(axis=1)                                    # pool2 -> (B, H)
    category = cat_feats @ params["catw"] + params["catb"]        # dropout = identity (eval)
    concat = jnp.concatenate([title, full, category], axis=1)     # (B, 3H)
    inter = jnp.maximum(concat @ params["iw"] + params["ib"], 0.0)
    return inter @ params["fw"] + params["fb"]                    # (B, 1)


def init_params(key, n_tokens, n_cat, hid):
    ks = jax.random.split(key, 13)
    s = 0.1
    return {
        "title_emb": jax.random.normal(ks[0], (n_tokens, hid), jnp.float32),
        "full_emb": jax.random.normal(ks[1], (n_tokens, hid), jnp.float32),
        "c1w": s * jax.random.normal(ks[2], (2, hid, hid), jnp.float32),
        "c1b": s * jax.random.normal(ks[3], (1, hid), jnp.float32),
        "c2w": s * jax.random.normal(ks[4], (2, hid, hid), jnp.float32),
        "c2b": s * jax.random.normal(ks[5], (1, hid), jnp.float32),
        "catw": s * jax.random.normal(ks[6], (n_cat, hid), jnp.float32),
        "catb": s * jax.random.normal(ks[7], (1, hid), jnp.float32),
        "iw": s * jax.random.normal(ks[8], (3 * hid, 2 * hid), jnp.float32),
        "ib": s * jax.random.normal(ks[9], (1, 2 * hid), jnp.float32),
        "fw": s * jax.random.normal(ks[10], (2 * hid, 1), jnp.float32),
        "fb": s * jax.random.normal(ks[11], (1, 1), jnp.float32),
    }


if __name__ == "__main__":
    # small shapes consistent with the module's forward
    B, L1, L2 = 2, 8, 8
    n_tokens, n_cat, hid = 50, 4, 32      # concat_number_of_features = 3 * hid = 96

    key = jax.random.PRNGKey(0)
    kp, k1, k2, k3, k4, k5, k6 = jax.random.split(key, 7)
    params = init_params(kp, n_tokens, n_cat, hid)

    # one-time weight fusion (hoisted out of the forward path)
    fused_f32 = prepare_params(params, use_bf16=False)
    fused_bf16 = prepare_params(params, use_bf16=True)

    input1 = jax.random.randint(k1, (B, L1), 0, n_tokens, dtype=jnp.int32)  # title ids
    input2 = jax.random.randint(k2, (B, L2), 0, n_tokens, dtype=jnp.int32)  # full-text ids
    input3 = jax.random.normal(k3, (B, n_cat), jnp.float32)                 # category feats

    ref = jax.block_until_ready(reference_net(input1, input2, input3, params))

    # f32 path: only weight-fusion reassociation -> tight tolerance
    out_f32 = jax.block_until_ready(three_inputs_net(input1, input2, input3, fused_f32))
    assert out_f32.shape == (B, 1)
    assert jnp.allclose(out_f32, ref, atol=1e-4, rtol=1e-4), (out_f32, ref)

    # bf16-input path (f32 accumulation): looser tolerance
    out_bf16 = jax.block_until_ready(three_inputs_net(input1, input2, input3, fused_bf16))
    assert out_bf16.shape == (B, 1)
    assert jnp.allclose(out_bf16, ref, atol=2e-2, rtol=2e-2), (out_bf16, ref)

    # larger batch: exercises multi-step grid, batch padding, bf16 sublane rounding
    B2 = 300
    in1 = jax.random.randint(k4, (B2, L1), 0, n_tokens, dtype=jnp.int32)
    in2 = jax.random.randint(k5, (B2, L2), 0, n_tokens, dtype=jnp.int32)
    in3 = jax.random.normal(k6, (B2, n_cat), jnp.float32)
    ref2 = jax.block_until_ready(reference_net(in1, in2, in3, params))
    out2 = jax.block_until_ready(
        three_inputs_net(in1, in2, in3, fused_bf16, batch_tile=128))
    assert out2.shape == (B2, 1)
    assert jnp.allclose(out2, ref2, atol=2e-2, rtol=2e-2)
    out3 = jax.block_until_ready(three_inputs_net(in1, in2, in3, fused_f32))
    assert jnp.allclose(out3, ref2, atol=1e-4, rtol=1e-4)

    print("KERNEL_OK")
</pallas_src>

<mosaic_0001>
module attributes {stable_mosaic.version = 11 : i64} {
  func.func @fused_forward_kernel(%arg0: i32, %arg1: memref<8x256xf32, #tpu.memory_space<vmem>>, %arg2: memref<256x128xf32, #tpu.memory_space<vmem>>, %arg3: memref<1x128xf32, #tpu.memory_space<vmem>>, %arg4: memref<1x128xf32, #tpu.memory_space<vmem>>, %arg5: memref<1x1xf32, #tpu.memory_space<vmem>>, %arg6: memref<8x1xf32, #tpu.memory_space<vmem>>) attributes {dimension_semantics = [#tpu.dimension_semantics<parallel>], iteration_bounds = array<i64: 1>, scalar_prefetch = 0 : i64, scratch_operands = 0 : i64, tpu.core_type = #tpu.core_type<tc>, window_params = [{transform_indices = @transform_0, window_bounds = array<i64: 8, 256>}, {pipeline_mode = #tpu.pipeline_mode<synchronous>, transform_indices = @transform_1, window_bounds = array<i64: 256, 128>}, {pipeline_mode = #tpu.pipeline_mode<synchronous>, transform_indices = @transform_2, window_bounds = array<i64: 1, 128>}, {pipeline_mode = #tpu.pipeline_mode<synchronous>, transform_indices = @transform_3, window_bounds = array<i64: 1, 128>}, {pipeline_mode = #tpu.pipeline_mode<synchronous>, transform_indices = @transform_4, window_bounds = array<i64: 1, 1>}, {transform_indices = @transform_5, window_bounds = array<i64: 8, 1>}]} {
    %c0 = arith.constant 0 : index
    %c0_0 = arith.constant 0 : index
    %0 = vector.load %arg1[%c0, %c0_0] : memref<8x256xf32, #tpu.memory_space<vmem>>, vector<8x256xf32>
    %c0_1 = arith.constant 0 : index
    %c0_2 = arith.constant 0 : index
    %1 = vector.load %arg2[%c0_1, %c0_2] : memref<256x128xf32, #tpu.memory_space<vmem>>, vector<256x128xf32>
    %cst = arith.constant dense<0.000000e+00> : vector<8x128xf32>
    %2 = tpu.matmul %0, %1, %cst {dimension_numbers = #tpu.dot_dimension_numbers<[1], [0], [0], [1], [0, 0, 1, 1], [], []>} : vector<8x256xf32>, vector<256x128xf32>, vector<8x128xf32> -> vector<8x128xf32>
    %c0_3 = arith.constant 0 : index
    %c0_4 = arith.constant 0 : index
    %3 = vector.load %arg3[%c0_3, %c0_4] : memref<1x128xf32, #tpu.memory_space<vmem>>, vector<1x128xf32>
    %4 = vector.broadcast %3 : vector<1x128xf32> to vector<8x128xf32>
    %5 = arith.addf %2, %4 : vector<8x128xf32>
    %cst_5 = arith.constant 0.000000e+00 : f32
    %6 = vector.broadcast %cst_5 : f32 to vector<8x128xf32>
    %7 = arith.maximumf %5, %6 : vector<8x128xf32>
    %c0_6 = arith.constant 0 : index
    %c0_7 = arith.constant 0 : index
    %8 = vector.load %arg4[%c0_6, %c0_7] : memref<1x128xf32, #tpu.memory_space<vmem>>, vector<1x128xf32>
    %9 = vector.broadcast %8 : vector<1x128xf32> to vector<8x128xf32>
    %10 = arith.mulf %7, %9 : vector<8x128xf32>
    %cst_8 = arith.constant dense<0.000000e+00> : vector<8xf32>
    %11 = vector.multi_reduction <add>, %10, %cst_8 [1] : vector<8x128xf32> to vector<8xf32>
    %12 = vector.shape_cast %11 : vector<8xf32> to vector<8x1xf32>
    %c0_9 = arith.constant 0 : index
    %c0_10 = arith.constant 0 : index
    %13 = vector.load %arg5[%c0_9, %c0_10] : memref<1x1xf32, #tpu.memory_space<vmem>>, vector<1x1xf32>
    %14 = vector.broadcast %13 : vector<1x1xf32> to vector<8x1xf32>
    %15 = arith.addf %12, %14 : vector<8x1xf32>
    %c0_11 = arith.constant 0 : index
    %c0_12 = arith.constant 0 : index
    %16 = vector.load %arg6[%c0_11, %c0_12] : memref<8x1xf32, #tpu.memory_space<vmem>>, vector<8x1xf32>
    tpu.vector_store %arg6[%c0_11, %c0_12], %15 {strides = array<i32>} : memref<8x1xf32, #tpu.memory_space<vmem>>, vector<8x1xf32>,
    return
  }
  func.func @transform_0(%arg0: i32) -> (i32, i32) {
    %c0_i32 = arith.constant 0 : i32
    %c0_i32_0 = arith.constant 0 : i32
    return %arg0, %c0_i32 : i32, i32
  }
  func.func @transform_1(%arg0: i32) -> (i32, i32) {
    %c0_i32 = arith.constant 0 : i32
    %c0_i32_0 = arith.constant 0 : i32
    %c0_i32_1 = arith.constant 0 : i32
    return %c0_i32, %c0_i32_0 : i32, i32
  }
  func.func @transform_2(%arg0: i32) -> (i32, i32) {
    %c0_i32 = arith.constant 0 : i32
    %c0_i32_0 = arith.constant 0 : i32
    %c0_i32_1 = arith.constant 0 : i32
    return %c0_i32, %c0_i32_0 : i32, i32
  }
  func.func @transform_3(%arg0: i32) -> (i32, i32) {
    %c0_i32 = arith.constant 0 : i32
    %c0_i32_0 = arith.constant 0 : i32
    %c0_i32_1 = arith.constant 0 : i32
    return %c0_i32, %c0_i32_0 : i32, i32
  }
  func.func @transform_4(%arg0: i32) -> (i32, i32) {
    %c0_i32 = arith.constant 0 : i32
    %c0_i32_0 = arith.constant 0 : i32
    %c0_i32_1 = arith.constant 0 : i32
    return %c0_i32, %c0_i32_0 : i32, i32
  }
  func.func @transform_5(%arg0: i32) -> (i32, i32) {
    %c0_i32 = arith.constant 0 : i32
    %c0_i32_0 = arith.constant 0 : i32
    return %arg0, %c0_i32 : i32, i32
  }
}

</mosaic_0001>

<llo_original>
// kernel: tpu_custom_call.1
$region0: #{tpu_custom_call.1}
  #allocation0 [shape = 'u32[]', space=smem, size = 0x4, offset = 0x4, fixed_abs, tag = 'smem constant byte address 0x4 - core index']
  #allocation1 [shape = 'u32[72,128]{1,0:T(1,128)}', space=vmem, size = 0x9000, scoped, tag = 'internal scratch']
  #allocation2 [shape = 'f32[1,1]{1,0:T(1,128)S(1)}', space=vmem, size = 0x200, scoped, tag = 'scoped memory for tpu_custom_call.1']
  %s0 = inlined_call_operand.hbm [shape: f32[8,256], index: 0, kind: input, shape index: {}]
  %s1 = inlined_call_operand.hbm [shape: f32[256,128], index: 1, kind: input, shape index: {}]
  %s2 = inlined_call_operand.vmem [shape: f32[1,128], index: 2, kind: input, shape index: {}]
  %s3 = inlined_call_operand.vmem [shape: f32[1,128], index: 3, kind: input, shape index: {}]
  %s4 = inlined_call_operand.<no memory space> [shape: f32[1,1], index: 4, kind: input, shape index: {}]
  %s5 = inlined_call_operand.vmem [shape: f32[8,1], index: 5, kind: output, shape index: {}]
  %s6 = sld [smem:[#allocation0]]
  $region38: #{tpu_custom_call.1} parent=0
    _
  %s8 = ssub.s32 1, %s6
  %s9 = scalar_select 0, %s8, %s6
  %v10 = vstv %s4
  %11 = vst [vmem:[#allocation2] sm:$0x1] %v10
  $region1: #{tpu_custom_call.1} parent=0
    #allocation3 [shape = 'u8[8192]{0}', space=vmem, size = 0x2000, scoped, tag = 'input window, operand 0, single buffered']
    #allocation4 [shape = 's32[1]{0}', space=sflag, size = 0x4, scoped, tag = 'scoped memory for tpu_custom_call.1']
    #allocation5 [shape = 'u8[131072]{0}', space=vmem, size = 0x20000, scoped, tag = 'input window, operand 1, single buffered']
    #allocation6 [shape = 's32[1]{0}', space=sflag, size = 0x4, scoped, tag = 'scoped memory for tpu_custom_call.1']
    %12 = vsyncpa [#allocation4], 0
    %13 = vsyncpa [#allocation6], 0
    // Predicated region
    $region2: #{tpu_custom_call.1} parent=1 // pred_check
      _
    $region3: #{tpu_custom_call.1} parent=1 // pred_check_branch
      %15 = sbr.rel (0) target = $region5
    $region4: #{tpu_custom_call.1} parent=1 // pred_region
      %17 = vsyncadd [#allocation4], 0
      %s19 = sshll.u32 %s0, 4
      %s20 = int_to_ptr.hbm [resolvable:$true] %s19
      %s21 = sshll.u32 [#allocation3], 4
      %s22 = int_to_ptr.vmem [resolvable:$true] %s21
      %24 = dma.hbm_to_vmem [thread:$0]  %s20, 256, %s22, [#allocation4]
    $region5: #{tpu_custom_call.1} parent=1 // pred_fallthru
      _
    // Predicated region
    $region6: #{tpu_custom_call.1} parent=1 // pred_check
      _
    $region7: #{tpu_custom_call.1} parent=1 // pred_check_branch
      %26 = sbr.rel (0) target = $region9
    $region8: #{tpu_custom_call.1} parent=1 // pred_region
      %28 = vsyncadd [#allocation6], 0
      %s29 = sshll.u32 %s1, 4
      %s30 = int_to_ptr.hbm [resolvable:$true] %s29
      %s31 = sshll.u32 [#allocation5], 4
      %s32 = int_to_ptr.vmem [resolvable:$true] %s31
      %37 = dma.hbm_to_vmem [thread:$0]  %s30, 4096, %s32, [#allocation6], 128, 128, 8
    $region9: #{tpu_custom_call.1} parent=1 // pred_fallthru
      _
    // Predicated region
    $region10: #{tpu_custom_call.1} parent=1 // pred_check
      _
    $region11: #{tpu_custom_call.1} parent=1 // pred_check_branch
      %39 = sbr.rel (0) target = $region13
    $region12: #{tpu_custom_call.1} parent=1 // pred_region
      _
    $region13: #{tpu_custom_call.1} parent=1 // pred_fallthru
      _
    // Predicated region
    $region14: #{tpu_custom_call.1} parent=1 // pred_check
      _
    $region15: #{tpu_custom_call.1} parent=1 // pred_check_branch
      %41 = sbr.rel (0) target = $region17
    $region16: #{tpu_custom_call.1} parent=1 // pred_region
      _
    $region17: #{tpu_custom_call.1} parent=1 // pred_fallthru
      _
    // Predicated region
    $region18: #{tpu_custom_call.1} parent=1 // pred_check
      _
    $region19: #{tpu_custom_call.1} parent=1 // pred_check_branch
      %43 = sbr.rel (0) target = $region21
    $region20: #{tpu_custom_call.1} parent=1 // pred_region
      _
    $region21: #{tpu_custom_call.1} parent=1 // pred_fallthru
      _
    // Predicated region
    $region22: #{tpu_custom_call.1} parent=1 // pred_check
      _
    $region23: #{tpu_custom_call.1} parent=1 // pred_check_branch
      %45 = sbr.rel (0) target = $region25
    $region24: #{tpu_custom_call.1} parent=1 // pred_region
      %47 = dma.done [#allocation4], 256
    $region25: #{tpu_custom_call.1} parent=1 // pred_fallthru
      _
    // Predicated region
    $region26: #{tpu_custom_call.1} parent=1 // pred_check
      _
    $region27: #{tpu_custom_call.1} parent=1 // pred_check_branch
      %49 = sbr.rel (0) target = $region29
    $region28: #{tpu_custom_call.1} parent=1 // pred_region
      %51 = dma.done [#allocation6], 4096
    $region29: #{tpu_custom_call.1} parent=1 // pred_fallthru
      _
    %v52 = vld [vmem:[#allocation3] sm:$0xff]
    %v53 = vld [vmem:[#allocation3 + $0x8] sm:$0xff]
    %v54 = vld [vmem:[#allocation5] sm:$0xff]
    %v55 = vld [vmem:[#allocation5 + $0x8] sm:$0xff]
    %v56 = vld [vmem:[#allocation5 + $0x10] sm:$0xff]
    %v57 = vld [vmem:[#allocation5 + $0x18] sm:$0xff]
    %v58 = vld [vmem:[#allocation5 + $0x20] sm:$0xff]
    %v59 = vld [vmem:[#allocation5 + $0x28] sm:$0xff]
    %v60 = vld [vmem:[#allocation5 + $0x30] sm:$0xff]
    %v61 = vld [vmem:[#allocation5 + $0x38] sm:$0xff]
    %v62 = vld [vmem:[#allocation5 + $0x40] sm:$0xff]
    %v63 = vld [vmem:[#allocation5 + $0x48] sm:$0xff]
    %v64 = vld [vmem:[#allocation5 + $0x50] sm:$0xff]
    %v65 = vld [vmem:[#allocation5 + $0x58] sm:$0xff]
    %v66 = vld [vmem:[#allocation5 + $0x60] sm:$0xff]
    %v67 = vld [vmem:[#allocation5 + $0x68] sm:$0xff]
    %v68 = vld [vmem:[#allocation5 + $0x70] sm:$0xff]
    %v69 = vld [vmem:[#allocation5 + $0x78] sm:$0xff]
    %v70 = vld [vmem:[#allocation5 + $0x80] sm:$0xff]
    %v71 = vld [vmem:[#allocation5 + $0x88] sm:$0xff]
    %v72 = vld [vmem:[#allocation5 + $0x90] sm:$0xff]
    %v73 = vld [vmem:[#allocation5 + $0x98] sm:$0xff]
    %v74 = vld [vmem:[#allocation5 + $0xa0] sm:$0xff]
    %v75 = vld [vmem:[#allocation5 + $0xa8] sm:$0xff]
    %v76 = vld [vmem:[#allocation5 + $0xb0] sm:$0xff]
    %v77 = vld [vmem:[#allocation5 + $0xb8] sm:$0xff]
    %v78 = vld [vmem:[#allocation5 + $0xc0] sm:$0xff]
    %v79 = vld [vmem:[#allocation5 + $0xc8] sm:$0xff]
    %v80 = vld [vmem:[#allocation5 + $0xd0] sm:$0xff]
    %v81 = vld [vmem:[#allocation5 + $0xd8] sm:$0xff]
    %v82 = vld [vmem:[#allocation5 + $0xe0] sm:$0xff]
    %v83 = vld [vmem:[#allocation5 + $0xe8] sm:$0xff]
    %v84 = vld [vmem:[#allocation5 + $0xf0] sm:$0xff]
    %v85 = vld [vmem:[#allocation5 + $0xf8] sm:$0xff]
    %v86 = vld [vmem:[%s2] sm:$0x1]
    %v88 = vperm.slane %v86, 0
    %90 = vmatpush.msra.mxu0 %v69
    %91 = vmatpush.msra.mxu0 %v68
    %92 = vmatpush.msra.mxu0 %v67
    %93 = vmatpush.msra.mxu0 %v66
    %94 = vmatpush.msra.mxu0 %v65
    %95 = vmatpush.msra.mxu0 %v64
    %96 = vmatpush.msra.mxu0 %v63
    %97 = vmatpush.msra.mxu0 %v62
    %98 = vmatpush.msra.mxu0 %v61
    %99 = vmatpush.msra.mxu0 %v60
    %100 = vmatpush.msra.mxu0 %v59
    %101 = vmatpush.msra.mxu0 %v58
    %102 = vmatpush.msra.mxu0 %v57
    %103 = vmatpush.msra.mxu0 %v56
    %104 = vmatpush.msra.mxu0 %v55
    %105 = vmatpush.msra.mxu0 %v54
    %106 = vmatmul.f32.gmra.mxu0 %v52
    %v107 = vpop.f32.mrf.mxu0
    %v108 = vadd.f32 %v88, %v107
    %109 = vdwg.mxu0
    %110 = vmatpush.msra.mxu0 %v85
    %111 = vmatpush.msra.mxu0 %v84
    %112 = vmatpush.msra.mxu0 %v83
    %113 = vmatpush.msra.mxu0 %v82
    %114 = vmatpush.msra.mxu0 %v81
    %115 = vmatpush.msra.mxu0 %v80
    %116 = vmatpush.msra.mxu0 %v79
    %117 = vmatpush.msra.mxu0 %v78
    %118 = vmatpush.msra.mxu0 %v77
    %119 = vmatpush.msra.mxu0 %v76
    %120 = vmatpush.msra.mxu0 %v75
    %121 = vmatpush.msra.mxu0 %v74
    %122 = vmatpush.msra.mxu0 %v73
    %123 = vmatpush.msra.mxu0 %v72
    %124 = vmatpush.msra.mxu0 %v71
    %125 = vmatpush.msra.mxu0 %v70
    %126 = vmatmul.f32.gmra.mxu0 %v53
    %v127 = vpop.f32.mrf.mxu0
    %v128 = vadd.f32 %v108, %v127
    %129 = vdwg.mxu0
    %v130 = vmax.f32 %v128, 0.0
    %v131 = vld [vmem:[%s3] sm:$0x1]
    %v133 = vperm.slane %v131, 0
    %v135 = vmul.f32 %v130, %v133
    %136 = vadd.xlane.f32.xlu0 %v135
    %v137 = vpop.xlane.xlu0 %136
    %v138 = vld [vmem:[#allocation2] sm:$0x1]
    %v140 = vperm.slane %v138, 0
    %v142 = vadd.f32 %v137, %v140
    %vm143 = vcmask 7168
    %144 = vst.msk [vmem:[%s5] sm:$0xff] %vm143, %v142
    // Predicated region
    $region30: #{tpu_custom_call.1} parent=1 // pred_check
      _
    $region31: #{tpu_custom_call.1} parent=1 // pred_check_branch
      %146 = sbr.rel (0) target = $region33
    $region32: #{tpu_custom_call.1} parent=1 // pred_region
      _
    $region33: #{tpu_custom_call.1} parent=1 // pred_fallthru
      _
    // Predicated region
    $region34: #{tpu_custom_call.1} parent=1 // pred_check
      _
    $region35: #{tpu_custom_call.1} parent=1 // pred_check_branch
      %148 = sbr.rel (0) target = $region37
    $region36: #{tpu_custom_call.1} parent=1 // pred_region
      _
    $region37: #{tpu_custom_call.1} parent=1 // pred_fallthru
      _
    %149 = vsyncpa [#allocation4], 1
    %150 = vsyncpa [#allocation6], 1

</llo_original>
